<compile_context>
chip_gen: v5e
topology: v5e:2x2
jax: 0.10.0
libtpu: 0.0.40
codegen_flags: <defaults>
</compile_context>

<pallas_src>
import functools

import jax
import jax.numpy as jnp
from jax import lax
from jax.experimental import pallas as pl
from jax.experimental.pallas import tpu as pltpu

ALPHA = 1.0
GAMMA = 2.0
LOG_CLAMP = -100.0  # PyTorch BCE clamps log terms at -100

LANE = 128
SUBLANE = 8
ACC_ROWS = 64          # 8 independent (8,128) accumulator tiles -> VPU ILP
MAX_BLOCK_ROWS = 4096  # 4096 * 128 * 4 B = 2 MiB per f32 input block


def _int_pow(x, n):
    """Unrolled integer power: stays on the VPU (no pow -> exp/log on EUP)."""
    if n == 0:
        return jnp.ones_like(x)
    acc = x
    for _ in range(n - 1):
        acc = acc * x
    return acc


def _focal_loss_kernel(p_ref, t_ref, part_ref, *, alpha, gamma, binary_targets,
                       block_rows, acc_rows, inner_steps, rows_valid,
                       needs_mask):
    c = pl.program_id(0)  # outer "parallel" chunk axis (megacore on v7x)
    s = pl.program_id(1)  # inner "arbitrary" reduction axis

    @pl.when(s == 0)
    def _():
        part_ref[...] = jnp.zeros_like(part_ref)

    p = p_ref[...].astype(jnp.float32)
    t = t_ref[...].astype(jnp.float32)

    if binary_targets:
        # Fast path (targets known to be in {0,1}):
        # 1 transcendental / element instead of 3 (log, log, exp).
        pt = jnp.where(t > 0.5, p, 1.0 - p)
        bce = -jnp.maximum(jnp.log(pt), LOG_CLAMP)
        omp = 1.0 - pt
    else:
        # NOTE: each log term is clamped at -100 BEFORE being weighted by
        # t / (1-t), exactly like PyTorch's BCE -- this keeps the p==0 / p==1
        # corners (and the neutral lane padding p=1, t=1) finite, never 0*inf.
        log_p = jnp.maximum(jnp.log(p), LOG_CLAMP)
        log_1mp = jnp.maximum(jnp.log(1.0 - p), LOG_CLAMP)
        # Folded form of -(t*log_p + (1-t)*log_1mp): one fewer VPU op/element.
        bce = -(log_1mp + t * (log_p - log_1mp))
        omp = 1.0 - jnp.exp(-bce)

    g = float(gamma)
    if g.is_integer() and 0 <= int(g) <= 8:
        mod = _int_pow(omp, int(g))           # gamma=2 -> omp * omp (VPU only)
    else:
        mod = omp ** g                        # general (float) gamma fallback
    fl = mod * bce
    if float(alpha) != 1.0:
        fl = float(alpha) * fl

    if needs_mask:
        # Mask (a) the garbage rows of a partial last block (Pallas does NOT
        # zero out-of-bounds block regions) and (b) the clamped duplicate
        # "overhang" step when n_blocks is not a multiple of num_chunks.
        # Bounds are trace-time constants; this is one iota/compare/select.
        gblk = c * inner_steps + s            # unclamped logical block index
        row_ids = gblk * block_rows + lax.broadcasted_iota(
            jnp.int32, fl.shape, 0)
        fl = jnp.where(row_ids < rows_valid, fl, 0.0)

    # Vector accumulation only: element-wise vreg adds into acc_rows x 128
    # (8 independent vreg tiles at acc_rows=64). The cross-lane reduce and the
    # divide-by-N happen once, on a tiny array, in the wrapper.
    if block_rows == acc_rows:
        part_ref[...] += fl
    else:
        part_ref[...] += jnp.sum(
            fl.reshape(block_rows // acc_rows, acc_rows, LANE), axis=0)


def focal_loss(inputs, targets, *, alpha=ALPHA, gamma=GAMMA,
               binary_targets=False, max_block_rows=MAX_BLOCK_ROWS):
    """Mean focal loss (logits=False, reduce=True). Returns a scalar f32."""
    assert inputs.shape == targets.shape
    total = int(inputs.size)
    assert total > 0

    flat_p = inputs.reshape(-1)
    flat_t = targets.reshape(-1)

    # Lane alignment: only the (rare) total % 128 != 0 case pays a copy, and
    # the pad is <= 127 neutral elements (p=1, t=1 -> bce=0, fl=0). All block
    # raggedness beyond that is masked in-kernel -- no padded copies of the
    # full arrays are ever materialized.
    pad = (-total) % LANE
    if pad:
        flat_p = jnp.concatenate([flat_p, jnp.ones((pad,), flat_p.dtype)])
        flat_t = jnp.concatenate([flat_t, jnp.ones((pad,), flat_t.dtype)])
    rows = (total + pad) // LANE

    p2d = flat_p.reshape(rows, LANE)
    t2d = flat_t.reshape(rows, LANE)

    if rows <= max_block_rows:
        block_rows = rows                     # single block (= full array dim)
        n_blocks = 1
    else:
        block_rows = max(SUBLANE, (max_block_rows // SUBLANE) * SUBLANE)
        n_blocks = -(-rows // block_rows)     # ceil

    # Outer "parallel" axis for v7x megacore (2 TCs); harmless on v5e/v6e.
    num_chunks = 2 if n_blocks >= 2 else 1
    inner_steps = -(-n_blocks // num_chunks)

    # Accumulator height: 64 rows (8 vreg tiles of ILP) when possible.
    if block_rows % ACC_ROWS == 0:
        acc_rows = ACC_ROWS
    elif block_rows % SUBLANE == 0:
        acc_rows = SUBLANE
    else:
        acc_rows = block_rows                 # tiny single-block case

    clamp_idx = (num_chunks * inner_steps != n_blocks)
    needs_mask = (rows % block_rows != 0) or clamp_idx
    last_block = n_blocks - 1

    def in_map(c, s):
        b = c * inner_steps + s
        if clamp_idx:
            # Keep the DMA in-bounds on the duplicate overhang step; its
            # contribution is zeroed by the in-kernel row mask.
            b = jnp.minimum(b, last_block)
        return (b, 0)

    kernel = functools.partial(
        _focal_loss_kernel, alpha=float(alpha), gamma=float(gamma),
        binary_targets=bool(binary_targets), block_rows=block_rows,
        acc_rows=acc_rows, inner_steps=inner_steps, rows_valid=rows,
        needs_mask=needs_mask)

    partials = pl.pallas_call(
        kernel,
        out_shape=jax.ShapeDtypeStruct((num_chunks * acc_rows, LANE),
                                       jnp.float32),
        grid_spec=pltpu.PrefetchScalarGridSpec(
            num_scalar_prefetch=0,
            grid=(num_chunks, inner_steps),
            in_specs=[
                pl.BlockSpec((block_rows, LANE), in_map),
                pl.BlockSpec((block_rows, LANE), in_map),
            ],
            # Per-chunk partial-sum block; resident across the inner axis.
            out_specs=pl.BlockSpec((acc_rows, LANE), lambda c, s: (c, 0)),
        ),
        compiler_params=pltpu.CompilerParams(
            dimension_semantics=("parallel", "arbitrary"),
            vmem_limit_bytes=48 * 1024 * 1024,
        ),
    )(p2d, t2d)

    # Single tiny final reduce + multiply-by-1/N (compile-time constant).
    return jnp.sum(partials) * (1.0 / float(total))


if __name__ == "__main__":
    key = jax.random.PRNGKey(0)
    k1, k2, k3, k4, k5, k6 = jax.random.split(key, 6)

    def ref_focal(p, t, alpha=ALPHA, gamma=GAMMA):
        log_p = jnp.maximum(jnp.log(p), LOG_CLAMP)
        log_1mp = jnp.maximum(jnp.log(1.0 - p), LOG_CLAMP)
        bce = -(t * log_p + (1.0 - t) * log_1mp)
        pt = jnp.exp(-bce)
        return jnp.mean(alpha * (1.0 - pt) ** gamma * bce)

    def check(got, want, name):
        got = jax.block_until_ready(got)
        assert jnp.allclose(got, want, rtol=1e-5, atol=1e-6), (name, got, want)

    # 1) Main case: NCHW probabilities (logits=False path) with binary targets.
    x_shape = (2, 4, 16, 16)  # 2048 elements
    inputs = jax.random.uniform(
        k1, x_shape, dtype=jnp.float32, minval=1e-4, maxval=1.0 - 1e-4)
    targets = (jax.random.uniform(k2, x_shape, dtype=jnp.float32) > 0.5
               ).astype(jnp.float32)
    want = ref_focal(inputs, targets)
    check(focal_loss(inputs, targets), want, "main/general")

    # 2) Same inputs through the binary-target fast path.
    check(focal_loss(inputs, targets, binary_targets=True), want, "main/binary")

    # 3) Ragged case: exercises the <=127-element lane pad + fractional targets.
    y_shape = (3, 5, 7)  # 105 elements, not lane-aligned
    p2 = jax.random.uniform(
        k3, y_shape, dtype=jnp.float32, minval=1e-4, maxval=1.0 - 1e-4)
    t2 = jax.random.uniform(k4, y_shape, dtype=jnp.float32)
    check(focal_loss(p2, t2), ref_focal(p2, t2), "ragged")

    # 4) Multi-block case with an odd block count: exercises the 2-chunk split,
    #    the clamped overhang step, and the partial-last-block row mask.
    z_shape = (4, 5, 128)  # 2560 elements -> 20 rows; 8-row blocks -> 3 blocks
    p3 = jax.random.uniform(
        k5, z_shape, dtype=jnp.float32, minval=1e-4, maxval=1.0 - 1e-4)
    t3 = jax.random.uniform(k6, z_shape, dtype=jnp.float32)
    check(focal_loss(p3, t3, max_block_rows=8), ref_focal(p3, t3), "multiblock")

    # 5) bf16 inputs streamed in bf16, computed in f32 inside the kernel.
    p_bf = inputs.astype(jnp.bfloat16)
    t_bf = targets.astype(jnp.bfloat16)
    want_bf = ref_focal(p_bf.astype(jnp.float32), t_bf.astype(jnp.float32))
    check(focal_loss(p_bf, t_bf), want_bf, "bf16")

    print("KERNEL_OK")
</pallas_src>

<mosaic_0001>
module attributes {stable_mosaic.version = 11 : i64} {
  func.func @_focal_loss_kernel(%arg0: i32, %arg1: i32, %arg2: memref<16x128xf32, #tpu.memory_space<vmem>>, %arg3: memref<16x128xf32, #tpu.memory_space<vmem>>, %arg4: memref<8x128xf32, #tpu.memory_space<vmem>>) attributes {dimension_semantics = [#tpu.dimension_semantics<parallel>, #tpu.dimension_semantics<arbitrary>], iteration_bounds = array<i64: 1, 1>, scalar_prefetch = 0 : i64, scratch_operands = 0 : i64, tpu.core_type = #tpu.core_type<tc>, window_params = [{transform_indices = @transform_0, window_bounds = array<i64: 16, 128>}, {transform_indices = @transform_1, window_bounds = array<i64: 16, 128>}, {transform_indices = @transform_2, window_bounds = array<i64: 8, 128>}]} {
    %c0_i32 = arith.constant 0 : i32
    %0 = arith.cmpi eq, %arg1, %c0_i32 : i32
    %1 = arith.extui %0 : i1 to i32
    %c0_i32_0 = arith.constant 0 : i32
    %2 = arith.cmpi ne, %1, %c0_i32_0 : i32
    scf.if %2 {
      %cst_14 = arith.constant 0.000000e+00 : f32
      %30 = vector.broadcast %cst_14 : f32 to vector<8x128xf32>
      %c0_15 = arith.constant 0 : index
      %c0_16 = arith.constant 0 : index
      %31 = vector.load %arg4[%c0_15, %c0_16] : memref<8x128xf32, #tpu.memory_space<vmem>>, vector<8x128xf32>
      tpu.vector_store %arg4[%c0_15, %c0_16], %30 {strides = array<i32>} : memref<8x128xf32, #tpu.memory_space<vmem>>, vector<8x128xf32>,
    } else {
    }
    %c0 = arith.constant 0 : index
    %c0_1 = arith.constant 0 : index
    %3 = vector.load %arg2[%c0, %c0_1] : memref<16x128xf32, #tpu.memory_space<vmem>>, vector<16x128xf32>
    %c0_2 = arith.constant 0 : index
    %c0_3 = arith.constant 0 : index
    %4 = vector.load %arg3[%c0_2, %c0_3] : memref<16x128xf32, #tpu.memory_space<vmem>>, vector<16x128xf32>
    %5 = math.log %3 : vector<16x128xf32>
    %cst = arith.constant -1.000000e+02 : f32
    %6 = vector.broadcast %cst : f32 to vector<16x128xf32>
    %7 = arith.maximumf %5, %6 : vector<16x128xf32>
    %cst_4 = arith.constant 1.000000e+00 : f32
    %8 = vector.broadcast %cst_4 : f32 to vector<16x128xf32>
    %9 = arith.subf %8, %3 : vector<16x128xf32>
    %10 = math.log %9 : vector<16x128xf32>
    %cst_5 = arith.constant -1.000000e+02 : f32
    %11 = vector.broadcast %cst_5 : f32 to vector<16x128xf32>
    %12 = arith.maximumf %10, %11 : vector<16x128xf32>
    %13 = arith.subf %7, %12 : vector<16x128xf32>
    %14 = arith.mulf %4, %13 : vector<16x128xf32>
    %15 = arith.addf %12, %14 : vector<16x128xf32>
    %cst_6 = arith.constant 0.000000e+00 : f32
    %16 = vector.broadcast %cst_6 : f32 to vector<16x128xf32>
    %17 = arith.subf %16, %15 : vector<16x128xf32>
    %cst_7 = arith.constant 0.000000e+00 : f32
    %18 = vector.broadcast %cst_7 : f32 to vector<16x128xf32>
    %19 = arith.subf %18, %17 : vector<16x128xf32>
    %20 = math.exp %19 : vector<16x128xf32>
    %cst_8 = arith.constant 1.000000e+00 : f32
    %21 = vector.broadcast %cst_8 : f32 to vector<16x128xf32>
    %22 = arith.subf %21, %20 : vector<16x128xf32>
    %23 = arith.mulf %22, %22 : vector<16x128xf32>
    %24 = arith.mulf %23, %17 : vector<16x128xf32>
    %c0_9 = arith.constant 0 : index
    %c0_10 = arith.constant 0 : index
    %25 = vector.load %arg4[%c0_9, %c0_10] : memref<8x128xf32, #tpu.memory_space<vmem>>, vector<8x128xf32>
    %26 = vector.shape_cast %24 : vector<16x128xf32> to vector<2x8x128xf32>
    %cst_11 = arith.constant dense<0.000000e+00> : vector<8x128xf32>
    %27 = vector.multi_reduction <add>, %26, %cst_11 [0] : vector<2x8x128xf32> to vector<8x128xf32>
    %28 = arith.addf %25, %27 : vector<8x128xf32>
    %c0_12 = arith.constant 0 : index
    %c0_13 = arith.constant 0 : index
    %29 = vector.load %arg4[%c0_12, %c0_13] : memref<8x128xf32, #tpu.memory_space<vmem>>, vector<8x128xf32>
    tpu.vector_store %arg4[%c0_12, %c0_13], %28 {strides = array<i32>} : memref<8x128xf32, #tpu.memory_space<vmem>>, vector<8x128xf32>,
    return
  }
  func.func @transform_0(%arg0: i32, %arg1: i32) -> (i32, i32) {
    %c1_i32 = arith.constant 1 : i32
    %0 = arith.muli %arg0, %c1_i32 : i32
    %1 = arith.addi %0, %arg1 : i32
    %c0_i32 = arith.constant 0 : i32
    %c0_i32_0 = arith.constant 0 : i32
    return %1, %c0_i32 : i32, i32
  }
  func.func @transform_1(%arg0: i32, %arg1: i32) -> (i32, i32) {
    %c1_i32 = arith.constant 1 : i32
    %0 = arith.muli %arg0, %c1_i32 : i32
    %1 = arith.addi %0, %arg1 : i32
    %c0_i32 = arith.constant 0 : i32
    %c0_i32_0 = arith.constant 0 : i32
    return %1, %c0_i32 : i32, i32
  }
  func.func @transform_2(%arg0: i32, %arg1: i32) -> (i32, i32) {
    %c0_i32 = arith.constant 0 : i32
    %c0_i32_0 = arith.constant 0 : i32
    return %arg0, %c0_i32 : i32, i32
  }
}

</mosaic_0001>

<llo_original>
// kernel: tpu_custom_call.1
$region0: #{tpu_custom_call.1}
  #allocation0 [shape = 'u32[]', space=smem, size = 0x4, offset = 0x4, fixed_abs, tag = 'smem constant byte address 0x4 - core index']
  #allocation1 [shape = 'u32[72,128]{1,0:T(1,128)}', space=vmem, size = 0x9000, scoped, tag = 'internal scratch']
  %s0 = inlined_call_operand.hbm [shape: f32[16,128], index: 0, kind: input, shape index: {}]
  %s1 = inlined_call_operand.hbm [shape: f32[16,128], index: 1, kind: input, shape index: {}]
  %s2 = inlined_call_operand.hbm [shape: f32[8,128], index: 2, kind: output, shape index: {}]
  %s3 = sld [smem:[#allocation0]]
  $region30: #{tpu_custom_call.1} parent=0
    _
  %s5 = ssub.s32 1, %s3
  %s6 = scalar_select 0, %s5, %s3
  $region1: #{tpu_custom_call.1} parent=0
    #allocation2 [shape = 'u8[8192]{0}', space=vmem, size = 0x2000, scoped, tag = 'input window, operand 0, single buffered']
    #allocation3 [shape = 's32[1]{0}', space=sflag, size = 0x4, scoped, tag = 'scoped memory for tpu_custom_call.1']
    #allocation4 [shape = 's32[1]{0}', space=sflag, size = 0x4, scoped, tag = 'scoped memory for tpu_custom_call.1']
    #allocation5 [shape = 'u8[8192]{0}', space=vmem, size = 0x2000, scoped, tag = 'input window, operand 1, single buffered']
    #allocation6 [shape = 's32[1]{0}', space=sflag, size = 0x4, scoped, tag = 'scoped memory for tpu_custom_call.1']
    #allocation7 [shape = 'u8[4096]{0}', space=vmem, size = 0x1000, scoped, tag = 'output window, operand 0, single buffered']
    %7 = vsyncpa [#allocation3], 0
    %8 = vsyncpa [#allocation6], 0
    %9 = vsyncpa [#allocation4], 0
    // Predicated region
    $region2: #{tpu_custom_call.1} parent=1 // pred_check
      _
    $region3: #{tpu_custom_call.1} parent=1 // pred_check_branch
      %11 = sbr.rel (0) target = $region5
    $region4: #{tpu_custom_call.1} parent=1 // pred_region
      %s12 = sadd.s32 0, 0
      %s13 = smul.u32 2, %s12
      %15 = vsyncadd [#allocation3], 0
      %s16 = smul.addr %s13, 8
      %s17 = scalar_lea.hbm %s0, %s16
      %s18 = sshll.u32 %s17, 4
      %s19 = int_to_ptr.hbm [resolvable:$true] %s18
      %s20 = sshll.u32 [#allocation2], 4
      %s21 = int_to_ptr.vmem [resolvable:$true] %s20
      %26 = dma.hbm_to_vmem [thread:$0]  %s19, 256, %s21, [#allocation3], 128, 128, 8
    $region5: #{tpu_custom_call.1} parent=1 // pred_fallthru
      _
    // Predicated region
    $region6: #{tpu_custom_call.1} parent=1 // pred_check
      _
    $region7: #{tpu_custom_call.1} parent=1 // pred_check_branch
      %28 = sbr.rel (0) target = $region9
    $region8: #{tpu_custom_call.1} parent=1 // pred_region
      %s29 = sadd.s32 0, 0
      %s30 = smul.u32 2, %s29
      %32 = vsyncadd [#allocation6], 0
      %s33 = smul.addr %s30, 8
      %s34 = scalar_lea.hbm %s1, %s33
      %s35 = sshll.u32 %s34, 4
      %s36 = int_to_ptr.hbm [resolvable:$true] %s35
      %s37 = sshll.u32 [#allocation5], 4
      %s38 = int_to_ptr.vmem [resolvable:$true] %s37
      %43 = dma.hbm_to_vmem [thread:$0]  %s36, 256, %s38, [#allocation6], 128, 128, 8
    $region9: #{tpu_custom_call.1} parent=1 // pred_fallthru
      _
    // Predicated region
    $region10: #{tpu_custom_call.1} parent=1 // pred_check
      _
    $region11: #{tpu_custom_call.1} parent=1 // pred_check_branch
      %45 = sbr.rel (0) target = $region13
    $region12: #{tpu_custom_call.1} parent=1 // pred_region
      %47 = dma.done [#allocation3], 256
    $region13: #{tpu_custom_call.1} parent=1 // pred_fallthru
      _
    // Predicated region
    $region14: #{tpu_custom_call.1} parent=1 // pred_check
      _
    $region15: #{tpu_custom_call.1} parent=1 // pred_check_branch
      %49 = sbr.rel (0) target = $region17
    $region16: #{tpu_custom_call.1} parent=1 // pred_region
      %51 = dma.done [#allocation6], 256
    $region17: #{tpu_custom_call.1} parent=1 // pred_fallthru
      _
    %s52 = sadd.s32 0, 0
    %s53 = smul.u32 2, %s52
    %s54 = sadd.s32 0, 0
    %s55 = smul.u32 2, %s54
    %p56 = scmp.eq.s32.totalorder 0, 0
    // Predicated region
    $region18: #{tpu_custom_call.1} parent=1 // pred_check
      %p57 = pneg %p56
    $region19: #{tpu_custom_call.1} parent=1 // pred_check_branch
      %59 = sbr.rel (%p57) target = $region21
    $region20: #{tpu_custom_call.1} parent=1 // pred_region
      %60 = vst [vmem:[#allocation7] sm:$0xff] 0.0
    $region21: #{tpu_custom_call.1} parent=1 // pred_fallthru
      _
    %v61 = vld [vmem:[#allocation2] sm:$0xff]
    %v62 = vld [vmem:[#allocation2 + $0x8] sm:$0xff]
    %v63 = vld [vmem:[#allocation5] sm:$0xff]
    %v64 = vld [vmem:[#allocation5 + $0x8] sm:$0xff]
    %v65 = vlog2.pop %v61
    %v66 = vmul.f32 %v65, 0.6931472
    %v67 = vlog2.pop %v62
    %v68 = vmul.f32 %v67, 0.6931472
    %v69 = vmax.f32 %v66, -100.0
    %v70 = vmax.f32 %v68, -100.0
    %v71 = vsub.f32 1.0, %v61
    %v72 = vsub.f32 1.0, %v62
    %v73 = vlog2.pop %v71
    %v74 = vmul.f32 %v73, 0.6931472
    %v75 = vlog2.pop %v72
    %v76 = vmul.f32 %v75, 0.6931472
    %v77 = vmax.f32 %v74, -100.0
    %v78 = vmax.f32 %v76, -100.0
    %v79 = vsub.f32 %v69, %v77
    %v80 = vsub.f32 %v70, %v78
    %v81 = vmul.f32 %v63, %v79
    %v82 = vmul.f32 %v64, %v80
    %v83 = vadd.f32 %v77, %v81
    %v84 = vadd.f32 %v78, %v82
    %v85 = vsub.f32 0.0, %v83
    %v86 = vsub.f32 0.0, %v84
    %v87 = vsub.f32 0.0, %v85
    %v88 = vsub.f32 0.0, %v86
    %v89 = vmul.f32 %v87, 1.442695
    %v90 = vpow.pop %v89
    %v91 = vmul.f32 %v88, 1.442695
    %v92 = vpow.pop %v91
    %v93 = vsub.f32 1.0, %v90
    %v94 = vsub.f32 1.0, %v92
    %v95 = vmul.f32 %v93, %v93
    %v96 = vmul.f32 %v94, %v94
    %v97 = vmul.f32 %v95, %v85
    %v98 = vmul.f32 %v96, %v86
    %v99 = vld [vmem:[#allocation7] sm:$0xff]
    %v100 = vadd.f32 %v97, %v98
    %v101 = vadd.f32 %v99, %v100
    %102 = vst [vmem:[#allocation7] sm:$0xff] %v101
    // Predicated region
    $region22: #{tpu_custom_call.1} parent=1 // pred_check
      _
    $region23: #{tpu_custom_call.1} parent=1 // pred_check_branch
      %104 = sbr.rel (0) target = $region25
    $region24: #{tpu_custom_call.1} parent=1 // pred_region
      %106 = vsyncadd [#allocation4], 0
      %s108 = sshll.u32 [#allocation7], 4
      %s109 = int_to_ptr.vmem [resolvable:$true] %s108
      %s110 = sshll.u32 %s2, 4
      %s111 = int_to_ptr.hbm [resolvable:$true] %s110
      %113 = dma.vmem_to_hbm [thread:$0]  %s109, 128, %s111, [#allocation4]
    $region25: #{tpu_custom_call.1} parent=1 // pred_fallthru
      _
    // Predicated region
    $region26: #{tpu_custom_call.1} parent=1 // pred_check
      _
    $region27: #{tpu_custom_call.1} parent=1 // pred_check_branch
      %115 = sbr.rel (0) target = $region29
    $region28: #{tpu_custom_call.1} parent=1 // pred_region
      %117 = dma.done [#allocation4], 128
    $region29: #{tpu_custom_call.1} parent=1 // pred_fallthru
      _
    %118 = vsyncpa [#allocation3], 1
    %119 = vsyncpa [#allocation6], 1
    %120 = vsyncpa [#allocation4], 1

</llo_original>
